<compile_context>
chip_gen: v7x
topology: tpu7x:2x2x1
jax: 0.10.0
libtpu: 0.0.40
codegen_flags: <defaults>
</compile_context>

<pallas_src>
import jax
import jax.numpy as jnp
from jax.experimental import pallas as pl
from jax.experimental.pallas import tpu as pltpu


def _round_up(n, m):
    return ((n + m - 1) // m) * m


def mlp_head_kernel(x_ref, w1_ref, b1_ref, w2_ref, b2_ref, w3_ref, b3_ref, o_ref):
    """One batch tile: x_ref [in, TB] (bf16); weights [out, in]; o_ref [num_out, TB]."""
    x = x_ref[...]                                                      # [in, TB]

    # Layer 1: Linear + ReLU   ([h, in] @ [in, TB] -> [h, TB], f32 accumulate)
    h1 = jnp.dot(w1_ref[...], x, preferred_element_type=jnp.float32)
    h1 = jnp.maximum(h1 + b1_ref[...], 0.0)

    # Layer 2: Linear + ReLU
    h2 = jnp.dot(w2_ref[...], h1.astype(w2_ref.dtype),
                 preferred_element_type=jnp.float32)
    h2 = jnp.maximum(h2 + b2_ref[...], 0.0)

    # Layer 3: Linear + Sigmoid  (lane-dense [num_out, TB] result)
    logits = jnp.dot(w3_ref[...], h2.astype(w3_ref.dtype),
                     preferred_element_type=jnp.float32)
    n_out = w3_ref.shape[0]
    if n_out == 1:
        logits = logits + b3_ref[0]                 # scalar bias read from SMEM
    else:
        for i in range(n_out):                      # n_out is tiny & static
            logits = logits.at[i:i + 1, :].add(b3_ref[i])

    o_ref[...] = jax.nn.sigmoid(logits).astype(o_ref.dtype)


def mlp_head(x, w1, b1, w2, b2, w3, b3, *, tile_b=4096,
             matmul_dtype=jnp.bfloat16):
    """x: [B, in_channels] f32.  Weights in torch layout [out, in], biases [out]."""
    B, in_channels = x.shape
    h_size = w1.shape[0]
    num_out = w3.shape[0]

    # Put batch on the lane axis; cast matmul operands to bf16 (f32 accumulation
    # happens in-kernel on the MXU; bias/ReLU/sigmoid remain f32).
    xt = x.T.astype(matmul_dtype)                       # [in, B]
    w1c = w1.astype(matmul_dtype)
    w2c = w2.astype(matmul_dtype)
    w3c = w3.astype(matmul_dtype)
    b1c = b1.reshape(h_size, 1).astype(jnp.float32)
    b2c = b2.reshape(h_size, 1).astype(jnp.float32)
    b3c = b3.reshape(num_out).astype(jnp.float32)

    # Tile the (lane) batch axis; pad B up to a multiple of the tile.
    tb = min(int(tile_b), _round_up(B, 128))
    bp = _round_up(B, tb)
    if bp != B:
        xt = jnp.pad(xt, ((0, 0), (0, bp - B)))
    grid = (bp // tb,)

    resident = lambda shape: pl.BlockSpec(shape, lambda i: (0, 0))

    out_t = pl.pallas_call(
        mlp_head_kernel,
        out_shape=jax.ShapeDtypeStruct((num_out, bp), jnp.float32),
        grid=grid,
        in_specs=[
            pl.BlockSpec((in_channels, tb), lambda i: (0, i)),   # streamed x tiles
            resident(w1c.shape), resident(b1c.shape),            # resident weights
            resident(w2c.shape), resident(b2c.shape),
            resident(w3c.shape),
            pl.BlockSpec(memory_space=pltpu.MemorySpace.SMEM),   # tiny final bias
        ],
        out_specs=pl.BlockSpec((num_out, tb), lambda i: (0, i)),
        compiler_params=pltpu.CompilerParams(
            dimension_semantics=("parallel",)),
    )(xt, w1c, b1c, w2c, b2c, w3c, b3c)

    return out_t[:, :B].T                                # [B, num_out]


def init_params(key, in_channels, h_size, num_out):
    """nn.Linear-style init U(-1/sqrt(fan_in), 1/sqrt(fan_in)); torch layout [out, in]."""
    ks = jax.random.split(key, 6)

    def lin(kw, kb, fan_in, fan_out):
        bound = 1.0 / (fan_in ** 0.5)
        w = jax.random.uniform(kw, (fan_out, fan_in), jnp.float32, -bound, bound)
        b = jax.random.uniform(kb, (fan_out,), jnp.float32, -bound, bound)
        return w, b

    w1, b1 = lin(ks[0], ks[1], in_channels, h_size)
    w2, b2 = lin(ks[2], ks[3], h_size, h_size)
    w3, b3 = lin(ks[4], ks[5], h_size, num_out)
    return w1, b1, w2, b2, w3, b3


def reference(x, w1, b1, w2, b2, w3, b3, matmul_dtype=jnp.bfloat16):
    """Pure-JAX mirror of the kernel math (same bf16 casts, f32 accumulation)."""
    xt = x.T.astype(matmul_dtype)
    h1 = jnp.maximum(
        jnp.dot(w1.astype(matmul_dtype), xt,
                preferred_element_type=jnp.float32) + b1.reshape(-1, 1), 0.0)
    h2 = jnp.maximum(
        jnp.dot(w2.astype(matmul_dtype), h1.astype(matmul_dtype),
                preferred_element_type=jnp.float32) + b2.reshape(-1, 1), 0.0)
    logits = jnp.dot(w3.astype(matmul_dtype), h2.astype(matmul_dtype),
                     preferred_element_type=jnp.float32) + b3.reshape(-1, 1)
    return jax.nn.sigmoid(logits).T


if __name__ == "__main__":
    # Small shapes consistent with the module: in_channels=32, h_size=10, num_out=1.
    B, in_channels, h_size, num_out = 300, 32, 10, 1

    key = jax.random.PRNGKey(0)
    kx, kp = jax.random.split(key)
    x = jax.random.normal(kx, (B, in_channels), jnp.float32)
    params = init_params(kp, in_channels, h_size, num_out)

    # tile_b=128 keeps the demo small while still exercising a multi-step grid
    # (B=300 -> padded to 384 -> 3 grid steps).  Production default is 4096.
    out = mlp_head(x, *params, tile_b=128)
    out = jax.block_until_ready(out)

    ref = reference(x, *params)
    assert out.shape == (B, num_out)
    assert jnp.allclose(out, ref, atol=1e-4, rtol=1e-4), "mismatch vs reference"

    print("KERNEL_OK")
</pallas_src>

<mosaic_0001>
module attributes {stable_mosaic.version = 11 : i64} {
  func.func @mlp_head_kernel(%arg0: i32, %arg1: memref<32x128xbf16, #tpu.memory_space<vmem>>, %arg2: memref<10x32xbf16, #tpu.memory_space<vmem>>, %arg3: memref<10x1xf32, #tpu.memory_space<vmem>>, %arg4: memref<10x10xbf16, #tpu.memory_space<vmem>>, %arg5: memref<10x1xf32, #tpu.memory_space<vmem>>, %arg6: memref<1x10xbf16, #tpu.memory_space<vmem>>, %arg7: memref<1xf32, #tpu.memory_space<smem>>, %arg8: memref<1x128xf32, #tpu.memory_space<vmem>>) attributes {dimension_semantics = [#tpu.dimension_semantics<parallel>], iteration_bounds = array<i64: 3>, scalar_prefetch = 0 : i64, scratch_operands = 0 : i64, tpu.core_type = #tpu.core_type<tc>, window_params = [{transform_indices = @transform_0, window_bounds = array<i64: 32, 128>}, {pipeline_mode = #tpu.pipeline_mode<synchronous>, transform_indices = @transform_1, window_bounds = array<i64: 10, 32>}, {pipeline_mode = #tpu.pipeline_mode<synchronous>, transform_indices = @transform_2, window_bounds = array<i64: 10, 1>}, {pipeline_mode = #tpu.pipeline_mode<synchronous>, transform_indices = @transform_3, window_bounds = array<i64: 10, 10>}, {pipeline_mode = #tpu.pipeline_mode<synchronous>, transform_indices = @transform_4, window_bounds = array<i64: 10, 1>}, {pipeline_mode = #tpu.pipeline_mode<synchronous>, transform_indices = @transform_5, window_bounds = array<i64: 1, 10>}, {transform_indices = @transform_6, window_bounds = array<i64: 1>}, {transform_indices = @transform_7, window_bounds = array<i64: 1, 128>}]} {
    %c0 = arith.constant 0 : index
    %c0_0 = arith.constant 0 : index
    %0 = vector.load %arg1[%c0, %c0_0] : memref<32x128xbf16, #tpu.memory_space<vmem>>, vector<32x128xbf16>
    %c0_1 = arith.constant 0 : index
    %c0_2 = arith.constant 0 : index
    %1 = vector.load %arg2[%c0_1, %c0_2] : memref<10x32xbf16, #tpu.memory_space<vmem>>, vector<10x32xbf16>
    %cst = arith.constant dense<0.000000e+00> : vector<10x128xf32>
    %2 = tpu.matmul %1, %0, %cst {dimension_numbers = #tpu.dot_dimension_numbers<[1], [0], [0], [1], [0, 0, 1, 1], [], []>} : vector<10x32xbf16>, vector<32x128xbf16>, vector<10x128xf32> -> vector<10x128xf32>
    %c0_3 = arith.constant 0 : index
    %c0_4 = arith.constant 0 : index
    %3 = vector.load %arg3[%c0_3, %c0_4] : memref<10x1xf32, #tpu.memory_space<vmem>>, vector<10x1xf32>
    %4 = vector.broadcast %3 : vector<10x1xf32> to vector<10x128xf32>
    %5 = arith.addf %2, %4 : vector<10x128xf32>
    %cst_5 = arith.constant 0.000000e+00 : f32
    %6 = vector.broadcast %cst_5 : f32 to vector<10x128xf32>
    %7 = arith.maximumf %5, %6 : vector<10x128xf32>
    %c0_6 = arith.constant 0 : index
    %c0_7 = arith.constant 0 : index
    %8 = vector.load %arg4[%c0_6, %c0_7] : memref<10x10xbf16, #tpu.memory_space<vmem>>, vector<10x10xbf16>
    %9 = arith.truncf %7 : vector<10x128xf32> to vector<10x128xbf16>
    %cst_8 = arith.constant dense<0.000000e+00> : vector<10x128xf32>
    %10 = tpu.matmul %8, %9, %cst_8 {dimension_numbers = #tpu.dot_dimension_numbers<[1], [0], [0], [1], [0, 0, 1, 1], [], []>} : vector<10x10xbf16>, vector<10x128xbf16>, vector<10x128xf32> -> vector<10x128xf32>
    %c0_9 = arith.constant 0 : index
    %c0_10 = arith.constant 0 : index
    %11 = vector.load %arg5[%c0_9, %c0_10] : memref<10x1xf32, #tpu.memory_space<vmem>>, vector<10x1xf32>
    %12 = vector.broadcast %11 : vector<10x1xf32> to vector<10x128xf32>
    %13 = arith.addf %10, %12 : vector<10x128xf32>
    %cst_11 = arith.constant 0.000000e+00 : f32
    %14 = vector.broadcast %cst_11 : f32 to vector<10x128xf32>
    %15 = arith.maximumf %13, %14 : vector<10x128xf32>
    %c0_12 = arith.constant 0 : index
    %c0_13 = arith.constant 0 : index
    %16 = vector.load %arg6[%c0_12, %c0_13] : memref<1x10xbf16, #tpu.memory_space<vmem>>, vector<1x10xbf16>
    %17 = arith.truncf %15 : vector<10x128xf32> to vector<10x128xbf16>
    %cst_14 = arith.constant dense<0.000000e+00> : vector<1x128xf32>
    %18 = tpu.matmul %16, %17, %cst_14 {dimension_numbers = #tpu.dot_dimension_numbers<[1], [0], [0], [1], [0, 0, 1, 1], [], []>} : vector<1x10xbf16>, vector<10x128xbf16>, vector<1x128xf32> -> vector<1x128xf32>
    %c0_15 = arith.constant 0 : index
    %19 = memref.load %arg7[%c0_15] : memref<1xf32, #tpu.memory_space<smem>>
    %20 = vector.broadcast %19 : f32 to vector<1x128xf32>
    %21 = arith.addf %18, %20 : vector<1x128xf32>
    %22 = arith.negf %21 : vector<1x128xf32>
    %23 = math.exp %22 : vector<1x128xf32>
    %cst_16 = arith.constant 1.000000e+00 : f32
    %24 = vector.broadcast %cst_16 : f32 to vector<1x128xf32>
    %25 = arith.addf %24, %23 : vector<1x128xf32>
    %26 = arith.divf %24, %25 : vector<1x128xf32>
    %c0_17 = arith.constant 0 : index
    %c0_18 = arith.constant 0 : index
    %27 = vector.load %arg8[%c0_17, %c0_18] : memref<1x128xf32, #tpu.memory_space<vmem>>, vector<1x128xf32>
    tpu.vector_store %arg8[%c0_17, %c0_18], %26 {strides = array<i32>} : memref<1x128xf32, #tpu.memory_space<vmem>>, vector<1x128xf32>,
    return
  }
  func.func @transform_0(%arg0: i32) -> (i32, i32) {
    %c0_i32 = arith.constant 0 : i32
    %c0_i32_0 = arith.constant 0 : i32
    return %c0_i32, %arg0 : i32, i32
  }
  func.func @transform_1(%arg0: i32) -> (i32, i32) {
    %c0_i32 = arith.constant 0 : i32
    %c0_i32_0 = arith.constant 0 : i32
    %c0_i32_1 = arith.constant 0 : i32
    return %c0_i32, %c0_i32_0 : i32, i32
  }
  func.func @transform_2(%arg0: i32) -> (i32, i32) {
    %c0_i32 = arith.constant 0 : i32
    %c0_i32_0 = arith.constant 0 : i32
    %c0_i32_1 = arith.constant 0 : i32
    return %c0_i32, %c0_i32_0 : i32, i32
  }
  func.func @transform_3(%arg0: i32) -> (i32, i32) {
    %c0_i32 = arith.constant 0 : i32
    %c0_i32_0 = arith.constant 0 : i32
    %c0_i32_1 = arith.constant 0 : i32
    return %c0_i32, %c0_i32_0 : i32, i32
  }
  func.func @transform_4(%arg0: i32) -> (i32, i32) {
    %c0_i32 = arith.constant 0 : i32
    %c0_i32_0 = arith.constant 0 : i32
    %c0_i32_1 = arith.constant 0 : i32
    return %c0_i32, %c0_i32_0 : i32, i32
  }
  func.func @transform_5(%arg0: i32) -> (i32, i32) {
    %c0_i32 = arith.constant 0 : i32
    %c0_i32_0 = arith.constant 0 : i32
    %c0_i32_1 = arith.constant 0 : i32
    return %c0_i32, %c0_i32_0 : i32, i32
  }
  func.func @transform_6(%arg0: i32) -> i32 {
    %c0_i32 = arith.constant 0 : i32
    %c0_i32_0 = arith.constant 0 : i32
    return %c0_i32 : i32
  }
  func.func @transform_7(%arg0: i32) -> (i32, i32) {
    %c0_i32 = arith.constant 0 : i32
    %c0_i32_0 = arith.constant 0 : i32
    return %c0_i32, %arg0 : i32, i32
  }
}

</mosaic_0001>

<llo_original>
// kernel: tpu_custom_call.1
$region0: #{tpu_custom_call.1}
  #allocation0 [shape = 'u32[]', space=smem, size = 0x4, offset = 0x4, fixed_abs, tag = 'smem constant byte address 0x4 - core index']
  #allocation1 [shape = 'u32[144,128]{1,0:T(1,128)}', space=vmem, size = 0x12000, scoped, tag = 'internal scratch']
  #allocation2 [shape = 'f32[1]{0:T(128)S(6)}', space=smem, size = 0x200, scoped, tag = 'scoped memory for tpu_custom_call.1']
  %s0 = inlined_call_operand.hbm [shape: bf16[32,384], index: 0, kind: input, shape index: {}]
  %s1 = inlined_call_operand.vmem [shape: bf16[10,32], index: 1, kind: input, shape index: {}]
  %s2 = inlined_call_operand.vmem [shape: f32[10,1], index: 2, kind: input, shape index: {}]
  %s3 = inlined_call_operand.vmem [shape: bf16[10,10], index: 3, kind: input, shape index: {}]
  %s4 = inlined_call_operand.vmem [shape: f32[10,1], index: 4, kind: input, shape index: {}]
  %s5 = inlined_call_operand.vmem [shape: bf16[1,10], index: 5, kind: input, shape index: {}]
  %s6 = inlined_call_operand.<no memory space> [shape: f32[1], index: 6, kind: input, shape index: {}]
  %s7 = inlined_call_operand.hbm [shape: f32[1,384], index: 7, kind: output, shape index: {}]
  %s8 = sld [smem:[#allocation0]]
  $region65: #{tpu_custom_call.1} parent=0
    _
  %s10 = ssub.s32 1, %s8
  %s11 = scalar_select 0, %s10, %s8
  %12 = sst [smem:[#allocation2]] %s6
  $region1: #{tpu_custom_call.1} parent=0
    #allocation3 [shape = 'u8[16384]{0}', space=vmem, size = 0x4000, scoped, tag = 'input window, operand 0']
    #allocation4 [shape = 's32[2]{0}', space=sflag, size = 0x8, scoped, tag = 'scoped memory for tpu_custom_call.1']
    #allocation5 [shape = 's32[2]{0}', space=sflag, size = 0x8, scoped, tag = 'scoped memory for tpu_custom_call.1']
    #allocation6 [shape = 'u8[1024]{0}', space=vmem, size = 0x400, scoped, tag = 'output window, operand 0']
    %13 = vsyncpa [#allocation4], 0
    %s14 = scalar_lea.sflag [#allocation4], 1
    %15 = vsyncpa %s14, 0
    %16 = vsyncpa [#allocation5], 0
    %s17 = scalar_lea.sflag [#allocation5], 1
    %18 = vsyncpa %s17, 0
    loop: start=0, step=1, limit=5
    $region2: #{tpu_custom_call.1} parent=1 // loop_pre_header
      _
    $region3: #{tpu_custom_call.1} parent=1 // loop_header
      %s20 = sphi 0, %s24
      %p21 = scmp.ge.s32.totalorder %s20, 5
      %s30 = sphi 0, %s32
      %s33 = sphi 0, %s30
      %s34 = sphi 0, %s33
      %s50 = sphi 0, %s34
      %s54 = sphi 0, %s54
      %s56 = sphi 0, %s54
      %s57 = sphi 0, %s56
      %s71 = sphi 0, %s57
      %s75 = sphi 0, %s75
      %s77 = sphi 0, %s75
      %s78 = sphi 0, %s77
      %s92 = sphi 0, %s78
      %s96 = sphi 0, %s96
      %s98 = sphi 0, %s96
      %s99 = sphi 0, %s98
      %s113 = sphi 0, %s99
      %s117 = sphi 0, %s117
      %s119 = sphi 0, %s117
      %s120 = sphi 0, %s119
      %s134 = sphi 0, %s120
      %s138 = sphi 0, %s138
      %s140 = sphi 0, %s138
      %s141 = sphi 0, %s140
      %s155 = sphi 0, %s141
      %s159 = sphi 0, %s159
      %s161 = sphi 0, %s159
      %s162 = sphi 0, %s161
      %s176 = sphi 0, %s162
      %s182 = sphi 0, %s184
      %s185 = sphi 0, %s182
      %s186 = sphi 0, %s185
      %s202 = sphi 0, %s186
    $region4: #{tpu_custom_call.1} parent=1 // loop_header_branch
      %23 = sbr.rel (%p21) target = $region8
    $region5: #{tpu_custom_call.1} parent=1 // loop_body
      %s25 = ssub.s32 %s20, 1
      %s26 = ssub.s32 %s20, 2
      %s27 = sadd.s32 %s20, 1
      %s28 = ssub.s32 %s20, %s27
      %p29 = scmp.eq.s32.totalorder %s28, 0
      %s31 = sadd.s32 %s30, 1
      %s32 = scalar_select %p29, %s30, %s31
      %p35 = pneg %p29
      %p36 = scmp.eq.s32.totalorder %s20, 2
      %p37 = por %p35, %p36
      %p38 = scmp.ne.s32.totalorder %s30, %s33
      %p39 = scmp.eq.s32.totalorder %s20, 0
      %p40 = por %p38, %p39
      %p41 = scmp.ne.s32.totalorder %s30, %s33
      %p42 = scmp.eq.s32.totalorder %s25, 2
      %p43 = por %p41, %p42
      %p44 = scmp.ne.s32.totalorder %s33, %s34
      %p45 = scmp.eq.s32.totalorder %s25, 0
      %p46 = por %p44, %p45
      %p47 = scmp.ne.s32.totalorder %s33, %s34
      %p48 = scmp.eq.s32.totalorder %s26, 2
      %p49 = por %p47, %p48
      %p51 = scmp.ne.s32.totalorder %s34, %s50
      %p52 = scmp.eq.s32.totalorder %s26, 0
      %p53 = por %p51, %p52
      %s55 = sadd.s32 %s54, 1
      %p58 = scmp.eq.s32.totalorder %s20, 2
      %p59 = scmp.ne.s32.totalorder %s54, %s56
      %p60 = scmp.eq.s32.totalorder %s20, 0
      %p61 = por %p59, %p60
      %p62 = scmp.ne.s32.totalorder %s54, %s56
      %p63 = scmp.eq.s32.totalorder %s25, 2
      %p64 = por %p62, %p63
      %p65 = scmp.ne.s32.totalorder %s56, %s57
      %p66 = scmp.eq.s32.totalorder %s25, 0
      %p67 = por %p65, %p66
      %p68 = scmp.ne.s32.totalorder %s56, %s57
      %p69 = scmp.eq.s32.totalorder %s26, 2
      %p70 = por %p68, %p69
      %p72 = scmp.ne.s32.totalorder %s57, %s71
      %p73 = scmp.eq.s32.totalorder %s26, 0
      %p74 = por %p72, %p73
      %s76 = sadd.s32 %s75, 1
      %p79 = scmp.eq.s32.totalorder %s20, 2
      %p80 = scmp.ne.s32.totalorder %s75, %s77
      %p81 = scmp.eq.s32.totalorder %s20, 0
      %p82 = por %p80, %p81
      %p83 = scmp.ne.s32.totalorder %s75, %s77
      %p84 = scmp.eq.s32.totalorder %s25, 2
      %p85 = por %p83, %p84
      %p86 = scmp.ne.s32.totalorder %s77, %s78
      %p87 = scmp.eq.s32.totalorder %s25, 0
      %p88 = por %p86, %p87
      %p89 = scmp.ne.s32.totalorder %s77, %s78
      %p90 = scmp.eq.s32.totalorder %s26, 2
      %p91 = por %p89, %p90
      %p93 = scmp.ne.s32.totalorder %s78, %s92
      %p94 = scmp.eq.s32.totalorder %s26, 0
      %p95 = por %p93, %p94
      %s97 = sadd.s32 %s96, 1
      %p100 = scmp.eq.s32.totalorder %s20, 2
      %p101 = scmp.ne.s32.totalorder %s96, %s98
      %p102 = scmp.eq.s32.totalorder %s20, 0
      %p103 = por %p101, %p102
      %p104 = scmp.ne.s32.totalorder %s96, %s98
      %p105 = scmp.eq.s32.totalorder %s25, 2
      %p106 = por %p104, %p105
      %p107 = scmp.ne.s32.totalorder %s98, %s99
      %p108 = scmp.eq.s32.totalorder %s25, 0
      %p109 = por %p107, %p108
      %p110 = scmp.ne.s32.totalorder %s98, %s99
      %p111 = scmp.eq.s32.totalorder %s26, 2
      %p112 = por %p110, %p111
      %p114 = scmp.ne.s32.totalorder %s99, %s113
      %p115 = scmp.eq.s32.totalorder %s26, 0
      %p116 = por %p114, %p115
      %s118 = sadd.s32 %s117, 1
      %p121 = scmp.eq.s32.totalorder %s20, 2
      %p122 = scmp.ne.s32.totalorder %s117, %s119
      %p123 = scmp.eq.s32.totalorder %s20, 0
      %p124 = por %p122, %p123
      %p125 = scmp.ne.s32.totalorder %s117, %s119
      %p126 = scmp.eq.s32.totalorder %s25, 2
      %p127 = por %p125, %p126
      %p128 = scmp.ne.s32.totalorder %s119, %s120
      %p129 = scmp.eq.s32.totalorder %s25, 0
      %p130 = por %p128, %p129
      %p131 = scmp.ne.s32.totalorder %s119, %s120
      %p132 = scmp.eq.s32.totalorder %s26, 2
      %p133 = por %p131, %p132
      %p135 = scmp.ne.s32.totalorder %s120, %s134
      %p136 = scmp.eq.s32.totalorder %s26, 0
      %p137 = por %p135, %p136
      %s139 = sadd.s32 %s138, 1
      %p142 = scmp.eq.s32.totalorder %s20, 2
      %p143 = scmp.ne.s32.totalorder %s138, %s140
      %p144 = scmp.eq.s32.totalorder %s20, 0
      %p145 = por %p143, %p144
      %p146 = scmp.ne.s32.totalorder %s138, %s140
      %p147 = scmp.eq.s32.totalorder %s25, 2
      %p148 = por %p146, %p147
      %p149 = scmp.ne.s32.totalorder %s140, %s141
      %p150 = scmp.eq.s32.totalorder %s25, 0
      %p151 = por %p149, %p150
      %p152 = scmp.ne.s32.totalorder %s140, %s141
      %p153 = scmp.eq.s32.totalorder %s26, 2
      %p154 = por %p152, %p153
      %p156 = scmp.ne.s32.totalorder %s141, %s155
      %p157 = scmp.eq.s32.totalorder %s26, 0
      %p158 = por %p156, %p157
      %s160 = sadd.s32 %s159, 1
      %p163 = scmp.eq.s32.totalorder %s20, 2
      %p164 = scmp.ne.s32.totalorder %s159, %s161
      %p165 = scmp.eq.s32.totalorder %s20, 0
      %p166 = por %p164, %p165
      %p167 = scmp.ne.s32.totalorder %s159, %s161
      %p168 = scmp.eq.s32.totalorder %s25, 2
      %p169 = por %p167, %p168
      %p170 = scmp.ne.s32.totalorder %s161, %s162
      %p171 = scmp.eq.s32.totalorder %s25, 0
      %p172 = por %p170, %p171
      %p173 = scmp.ne.s32.totalorder %s161, %s162
      %p174 = scmp.eq.s32.totalorder %s26, 2
      %p175 = por %p173, %p174
      %p177 = scmp.ne.s32.totalorder %s162, %s176
      %p178 = scmp.eq.s32.totalorder %s26, 0
      %p179 = por %p177, %p178
      %s180 = ssub.s32 %s20, %s27
      %p181 = scmp.eq.s32.totalorder %s180, 0
      %s183 = sadd.s32 %s182, 1
      %s184 = scalar_select %p181, %s182, %s183
      %p187 = pneg %p181
      %p188 = scmp.eq.s32.totalorder %s20, 2
      %p189 = por %p187, %p188
      %p190 = scmp.ne.s32.totalorder %s182, %s185
      %p191 = scmp.eq.s32.totalorder %s20, 0
      %p192 = por %p190, %p191
      %p193 = scmp.ne.s32.totalorder %s182, %s185
      %p194 = scmp.eq.s32.totalorder %s25, 2
      %p195 = por %p193, %p194
      %p196 = scmp.ne.s32.totalorder %s185, %s186
      %p197 = scmp.eq.s32.totalorder %s25, 0
      %p198 = por %p196, %p197
      %p199 = scmp.ne.s32.totalorder %s185, %s186
      %p200 = scmp.eq.s32.totalorder %s26, 2
      %p201 = por %p199, %p200
      %p203 = scmp.ne.s32.totalorder %s186, %s202
      %p204 = scmp.eq.s32.totalorder %s26, 0
      %p205 = por %p203, %p204
      %p206 = scmp.le.s32.totalorder 1, %s20
      %p207 = scmp.lt.s32.totalorder %s20, 4
      %p208 = pnand %p206, %p207
      %p209 = pneg %p208
      // Predicated region
      $region9: #{tpu_custom_call.1} parent=5 // pred_check
        _
      $region10: #{tpu_custom_call.1} parent=5 // pred_check_branch
        %211 = sbr.rel (%p208) target = $region12
      $region11: #{tpu_custom_call.1} parent=5 // pred_region
        %s212 = ssub.s32 %s20, 1
        // Predicated region
        $region13: #{tpu_custom_call.1} parent=11 // pred_check
          %p213 = pneg %p67
        $region14: #{tpu_custom_call.1} parent=11 // pred_check_branch
          %215 = sbr.rel (%p213) target = $region16
        $region15: #{tpu_custom_call.1} parent=11 // pred_region
          _
        $region16: #{tpu_custom_call.1} parent=11 // pred_fallthru
          _
        // Predicated region
        $region17: #{tpu_custom_call.1} parent=11 // pred_check
          %p216 = pneg %p88
        $region18: #{tpu_custom_call.1} parent=11 // pred_check_branch
          %218 = sbr.rel (%p216) target = $region20
        $region19: #{tpu_custom_call.1} parent=11 // pred_region
          _
        $region20: #{tpu_custom_call.1} parent=11 // pred_fallthru
          _
        // Predicated region
        $region21: #{tpu_custom_call.1} parent=11 // pred_check
          %p219 = pneg %p109
        $region22: #{tpu_custom_call.1} parent=11 // pred_check_branch
          %221 = sbr.rel (%p219) target = $region24
        $region23: #{tpu_custom_call.1} parent=11 // pred_region
          _
        $region24: #{tpu_custom_call.1} parent=11 // pred_fallthru
          _
        // Predicated region
        $region25: #{tpu_custom_call.1} parent=11 // pred_check
          %p222 = pneg %p130
        $region26: #{tpu_custom_call.1} parent=11 // pred_check_branch
          %224 = sbr.rel (%p222) target = $region28
        $region27: #{tpu_custom_call.1} parent=11 // pred_region
          _
        $region28: #{tpu_custom_call.1} parent=11 // pred_fallthru
          _
        // Predicated region
        $region29: #{tpu_custom_call.1} parent=11 // pred_check
          %p225 = pneg %p151
        $region30: #{tpu_custom_call.1} parent=11 // pred_check_branch
          %227 = sbr.rel (%p225) target = $region32
        $region31: #{tpu_custom_call.1} parent=11 // pred_region
          _
        $region32: #{tpu_custom_call.1} parent=11 // pred_fallthru
          _
        // Predicated region
        $region33: #{tpu_custom_call.1} parent=11 // pred_check
          %p228 = pneg %p172
        $region34: #{tpu_custom_call.1} parent=11 // pred_check_branch
          %230 = sbr.rel (%p228) target = $region36
        $region35: #{tpu_custom_call.1} parent=11 // pred_region
          _
        $region36: #{tpu_custom_call.1} parent=11 // pred_fallthru
          _
      $region12: #{tpu_custom_call.1} parent=5 // pred_fallthru
        _
      %p231 = scmp.lt.s32.totalorder %s20, 3
      // Predicated region
      $region37: #{tpu_custom_call.1} parent=5 // pred_check
        %p232 = pneg %p231
      $region38: #{tpu_custom_call.1} parent=5 // pred_check_branch
        %234 = sbr.rel (%p232) target = $region40
      $region39: #{tpu_custom_call.1} parent=5 // pred_region
        // Predicated region
        $region41: #{tpu_custom_call.1} parent=39 // pred_check
          %p235 = pneg %p40
        $region42: #{tpu_custom_call.1} parent=39 // pred_check_branch
          %237 = sbr.rel (%p235) target = $region44
        $region43: #{tpu_custom_call.1} parent=39 // pred_region
          %s238 = sand.u32 %s30, 1
          %s239 = scalar_lea.sflag [#allocation4], %s238
          %s240 = sand.u32 %s30, 1
          %s241 = smul.addr %s240, 16
          %s242 = scalar_lea.vmem [#allocation3], %s241
          %s244 = ssub.s32 256, 256
          %245 = vsyncadd %s239, %s244
          %s246 = smul.addr %s20, 64
          %s247 = scalar_lea.hbm %s0, %s246
          %s248 = sshll.u32 %s242, 4
          %s249 = int_to_ptr.vmem [resolvable:$true] %s248
          %254 = dma.hbm_to_vmem [thread:$0]  %s247, 256, %s249, %s239, 192, 64, 4
        $region44: #{tpu_custom_call.1} parent=39 // pred_fallthru
          _
      $region40: #{tpu_custom_call.1} parent=5 // pred_fallthru
        _
      %p255 = scmp.le.s32.totalorder 1, %s20
      %p256 = scmp.lt.s32.totalorder %s20, 4
      %p257 = pnand %p255, %p256
      %p258 = pneg %p257
      // Predicated region
      $region45: #{tpu_custom_call.1} parent=5 // pred_check
        _
      $region46: #{tpu_custom_call.1} parent=5 // pred_check_branch
        %260 = sbr.rel (%p257) target = $region48
      $region47: #{tpu_custom_call.1} parent=5 // pred_region
        %s261 = ssub.s32 %s20, 1
        %s262 = sand.u32 %s33, 1
        %s263 = scalar_lea.sflag [#allocation4], %s262
        %s264 = sand.u32 %s33, 1
        %s265 = smul.addr %s264, 16
        %s266 = scalar_lea.vmem [#allocation3], %s265
        // Predicated region
        $region49: #{tpu_custom_call.1} parent=47 // pred_check
          %p267 = pneg %p46
        $region50: #{tpu_custom_call.1} parent=47 // pred_check_branch
          %269 = sbr.rel (%p267) target = $region52
        $region51: #{tpu_custom_call.1} parent=47 // pred_region
          %270 = dma.done %s263, 256
        $region52: #{tpu_custom_call.1} parent=47 // pred_fallthru
          _
        %s271 = sand.u32 %s33, 1
        %s272 = scalar_lea.sflag [#allocation4], %s271
        %s273 = sand.u32 %s33, 1
        %s274 = smul.addr %s273, 16
        %s275 = scalar_lea.vmem [#allocation3], %s274
        %p276 = pneg %p46
        %p277 = pneg %p43
        %p278 = pneg %p67
        %p279 = pneg %p64
        %p280 = pneg %p88
        %p281 = pneg %p85
        %p282 = pneg %p109
        %p283 = pneg %p106
        %p284 = pneg %p130
        %p285 = pneg %p127
        %p286 = pneg %p151
        %p287 = pneg %p148
        %p288 = pneg %p172
        %p289 = pneg %p169
        %p290 = pneg %p198
        %p291 = pneg %p195
        %s292 = sand.u32 %s185, 1
        %s293 = scalar_lea.sflag [#allocation5], %s292
        %s294 = sand.u32 %s185, 1
        %s295 = scalar_lea.vmem [#allocation6], %s294
        %v297 = vld [vmem:[%s266] sm:$0xf]
        %v298 = vld [vmem:[%s266 + $0x4] sm:$0xf]
        %v299 = vld [vmem:[%s266 + $0x8] sm:$0xf]
        %v300 = vld [vmem:[%s266 + $0xc] sm:$0xf]
        %v301 = vld [vmem:[%s1] sm:$0xf]
        %v302 = vld [vmem:[%s1 + $0x4] sm:$0x1]
        %v303 = vld [vmem:[%s2] sm:$0xff]
        %v304 = vld [vmem:[%s2 + $0x8] sm:$0x3]
        %306 = vset.pattern.permute.xlu0 0
        %307 = vperm.xlu0 %306, %v303
        %v308 = vpop.permute.xlu0 %307
        %311 = vset.pattern.permute.xlu0 0
        %312 = vperm.xlu0 %311, %v304
        %v313 = vpop.permute.xlu0 %312
        %v317 = vunpack.c.l.b16 %v301
        %v318 = vunpack.c.l.b16 %v302
        %v319 = vpack.c.b16 %v318, %v317
        %v324 = vunpack.c.l.b16 %v297
        %v325 = vunpack.c.l.b16 %v298
        %v326 = vunpack.c.l.b16 %v299
        %v327 = vunpack.c.l.b16 %v300
        %v328 = vpack.c.b16 %v325, %v324
        %v329 = vpack.c.b16 %v327, %v326
        %vm332 = vcmask 261120
        %v334 = vsel %vm332, %v319, 0
        %336 = vmatprep.subr.bf16.mxu0 0
        %337 = vmatpush1.bf16.msra.mxu0 %v328
        %338 = vmatprep.subr.bf16.mxu0 0
        %339 = vmatpush1.bf16.msra.mxu0 %v329
        %340 = vmatprep.subr.bf16.mxu0 0
        %341 = vmatpush1.bf16.msra.mxu0 0
        %342 = vmatprep.subr.bf16.mxu0 0
        %343 = vmatpush1.bf16.msra.mxu0 0
        %344 = vmatprep.subr.bf16.mxu0 0
        %345 = vmatpush1.bf16.msra.mxu0 0
        %346 = vmatprep.subr.bf16.mxu0 0
        %347 = vmatpush1.bf16.msra.mxu0 0
        %348 = vmatprep.subr.bf16.mxu0 0
        %349 = vmatpush1.bf16.msra.mxu0 0
        %350 = vmatprep.subr.bf16.mxu0 0
        %351 = vmatpush1.bf16.msra.mxu0 0
        %352 = vmatprep.subr.bf16.mxu0 0
        %353 = vmatpush1.bf16.msra.mxu0 0
        %354 = vmatprep.subr.bf16.mxu0 0
        %355 = vmatpush1.bf16.msra.mxu0 0
        %356 = vmatprep.subr.bf16.mxu0 0
        %357 = vmatpush1.bf16.msra.mxu0 0
        %358 = vmatprep.subr.bf16.mxu0 0
        %359 = vmatpush1.bf16.msra.mxu0 0
        %360 = vmatprep.subr.bf16.mxu0 0
        %361 = vmatpush1.bf16.msra.mxu0 0
        %362 = vmatprep.subr.bf16.mxu0 0
        %363 = vmatpush1.bf16.msra.mxu0 0
        %364 = vmatprep.subr.bf16.mxu0 0
        %365 = vmatpush1.bf16.msra.mxu0 0
        %366 = vmatprep.subr.bf16.mxu0 0
        %367 = vmatpush1.bf16.msra.mxu0 0
        %368 = vmatprep.mubr.bf16.mxu0 0
        %369 = vmatmul.mubr.bf16.gmra.mrb[0].mxu0 %v334
        %v370 = vpop.f32.mrb[0].mxu0
        %v371 = vadd.f32 %v308, %v370
        %v372 = vpop.f32.mrb[0].mxu0
        %v373 = vpop.f32.mrb[0].mxu0
        %v374 = vadd.f32 %v313, %v373
        %v375 = vpop.f32.mrb[0].mxu0
        %376 = vdwg.mxu0
        %v377 = vmax.f32 %v371, 0.0
        %v378 = vmax.f32 %v374, 0.0
        %v379 = vld [vmem:[%s3] sm:$0xf]
        %v380 = vld [vmem:[%s3 + $0x4] sm:$0x1]
        %v381 = vpack.c.bf16 %v378, %v377
        %v382 = vld [vmem:[%s4] sm:$0xff]
        %v383 = vld [vmem:[%s4 + $0x8] sm:$0x3]
        %385 = vset.pattern.permute.xlu0 0
        %386 = vperm.xlu0 %385, %v382
        %v387 = vpop.permute.xlu0 %386
        %390 = vset.pattern.permute.xlu0 0
        %391 = vperm.xlu0 %390, %v383
        %v392 = vpop.permute.xlu0 %391
        %v396 = vunpack.c.l.b16 %v379
        %v397 = vunpack.c.l.b16 %v380
        %v398 = vpack.c.b16 %v397, %v396
        %vm399 = vcmask 80896
        %v401 = vsel %vm399, %v398, 0
        %vm403 = vcmask 1044480
        %v405 = vsel %vm403, %v381, 0
        %407 = vmatprep.subr.bf16.mxu0 0
        %408 = vmatpush1.bf16.msra.mxu0 %v405
        %409 = vmatprep.subr.bf16.mxu0 0
        %410 = vmatpush1.bf16.msra.mxu0 0
        %411 = vmatprep.subr.bf16.mxu0 0
        %412 = vmatpush1.bf16.msra.mxu0 0
        %413 = vmatprep.subr.bf16.mxu0 0
        %414 = vmatpush1.bf16.msra.mxu0 0
        %415 = vmatprep.subr.bf16.mxu0 0
        %416 = vmatpush1.bf16.msra.mxu0 0
        %417 = vmatprep.subr.bf16.mxu0 0
        %418 = vmatpush1.bf16.msra.mxu0 0
        %419 = vmatprep.subr.bf16.mxu0 0
        %420 = vmatpush1.bf16.msra.mxu0 0
        %421 = vmatprep.subr.bf16.mxu0 0
        %422 = vmatpush1.bf16.msra.mxu0 0
        %423 = vmatprep.subr.bf16.mxu0 0
        %424 = vmatpush1.bf16.msra.mxu0 0
        %425 = vmatprep.subr.bf16.mxu0 0
        %426 = vmatpush1.bf16.msra.mxu0 0
        %427 = vmatprep.subr.bf16.mxu0 0
        %428 = vmatpush1.bf16.msra.mxu0 0
        %429 = vmatprep.subr.bf16.mxu0 0
        %430 = vmatpush1.bf16.msra.mxu0 0
        %431 = vmatprep.subr.bf16.mxu0 0
        %432 = vmatpush1.bf16.msra.mxu0 0
        %433 = vmatprep.subr.bf16.mxu0 0
        %434 = vmatpush1.bf16.msra.mxu0 0
        %435 = vmatprep.subr.bf16.mxu0 0
        %436 = vmatpush1.bf16.msra.mxu0 0
        %437 = vmatprep.subr.bf16.mxu0 0
        %438 = vmatpush1.bf16.msra.mxu0 0
        %439 = vmatprep.mubr.bf16.mxu0 0
        %440 = vmatmul.mubr.bf16.gmra.mrb[0].mxu0 %v401
        %v441 = vpop.f32.mrb[0].mxu0
        %v442 = vadd.f32 %v387, %v441
        %v443 = vpop.f32.mrb[0].mxu0
        %v444 = vpop.f32.mrb[0].mxu0
        %v445 = vadd.f32 %v392, %v444
        %v446 = vpop.f32.mrb[0].mxu0
        %447 = vdwg.mxu0
        %v448 = vmax.f32 %v442, 0.0
        %v449 = vmax.f32 %v445, 0.0
        %v450 = vld [vmem:[%s5] sm:$0x1]
        %v451 = vpack.c.bf16 %v449, %v448
        %s452 = sld [smem:[#allocation2]]
        %v453 = vstv %s452
        %v455 = vsel %vm399, %v450, 0
        %v458 = vsel %vm403, %v451, 0
        %460 = vmatprep.subr.bf16.mxu0 0
        %461 = vmatpush1.bf16.msra.mxu0 %v458
        %462 = vmatprep.subr.bf16.mxu0 0
        %463 = vmatpush1.bf16.msra.mxu0 0
        %464 = vmatprep.subr.bf16.mxu0 0
        %465 = vmatpush1.bf16.msra.mxu0 0
        %466 = vmatprep.subr.bf16.mxu0 0
        %467 = vmatpush1.bf16.msra.mxu0 0
        %468 = vmatprep.subr.bf16.mxu0 0
        %469 = vmatpush1.bf16.msra.mxu0 0
        %470 = vmatprep.subr.bf16.mxu0 0
        %471 = vmatpush1.bf16.msra.mxu0 0
        %472 = vmatprep.subr.bf16.mxu0 0
        %473 = vmatpush1.bf16.msra.mxu0 0
        %474 = vmatprep.subr.bf16.mxu0 0
        %475 = vmatpush1.bf16.msra.mxu0 0
        %476 = vmatprep.subr.bf16.mxu0 0
        %477 = vmatpush1.bf16.msra.mxu0 0
        %478 = vmatprep.subr.bf16.mxu0 0
        %479 = vmatpush1.bf16.msra.mxu0 0
        %480 = vmatprep.subr.bf16.mxu0 0
        %481 = vmatpush1.bf16.msra.mxu0 0
        %482 = vmatprep.subr.bf16.mxu0 0
        %483 = vmatpush1.bf16.msra.mxu0 0
        %484 = vmatprep.subr.bf16.mxu0 0
        %485 = vmatpush1.bf16.msra.mxu0 0
        %486 = vmatprep.subr.bf16.mxu0 0
        %487 = vmatpush1.bf16.msra.mxu0 0
        %488 = vmatprep.subr.bf16.mxu0 0
        %489 = vmatpush1.bf16.msra.mxu0 0
        %490 = vmatprep.subr.bf16.mxu0 0
        %491 = vmatpush1.bf16.msra.mxu0 0
        %492 = vmatprep.mubr.bf16.mxu0 0
        %493 = vmatmul.mubr.bf16.gmra.mrb[0].mxu0 %v455
        %v494 = vpop.f32.mrb[0].mxu0
        %v495 = vadd.f32 %v453, %v494
        %v496 = vpop.f32.mrb[0].mxu0
        %v497 = vpop.f32.mrb[0].mxu0
        %v498 = vpop.f32.mrb[0].mxu0
        %499 = vdwg.mxu0
        %v500 = vxor.u32 %v495, 2147483648
        %v501 = vmul.f32 %v500, 1.442695
        %v502 = vpow.pop %v501
        %v503 = vadd.f32 %v502, 1.0
        %v504 = vrcp.pop %v503
        %v505 = vmul.f32 1.0, %v504
        %506 = vst [vmem:[%s295] sm:$0x1] %v505
        %s507 = sand.u32 %s185, 1
        %s508 = scalar_lea.sflag [#allocation5], %s507
        %s509 = sand.u32 %s185, 1
        %s510 = scalar_lea.vmem [#allocation6], %s509
        // Predicated region
        $region53: #{tpu_custom_call.1} parent=47 // pred_check
          %p511 = pneg %p195
        $region54: #{tpu_custom_call.1} parent=47 // pred_check_branch
          %513 = sbr.rel (%p511) target = $region56
        $region55: #{tpu_custom_call.1} parent=47 // pred_region
          %s515 = ssub.s32 16, 16
          %516 = vsyncadd %s508, %s515
          %s517 = smul.addr %s25, 16
          %s518 = scalar_lea.hbm %s7, %s517
          %s520 = sshll.u32 %s510, 4
          %s521 = int_to_ptr.vmem [resolvable:$true] %s520
          %523 = dma.vmem_to_hbm [thread:$0]  %s521, 16, %s518, %s508
        $region56: #{tpu_custom_call.1} parent=47 // pred_fallthru
          _
      $region48: #{tpu_custom_call.1} parent=5 // pred_fallthru
        _
      %p524 = scmp.le.s32.totalorder 2, %s20
      // Predicated region
      $region57: #{tpu_custom_call.1} parent=5 // pred_check
        %p525 = pneg %p524
      $region58: #{tpu_custom_call.1} parent=5 // pred_check_branch
        %527 = sbr.rel (%p525) target = $region60
      $region59: #{tpu_custom_call.1} parent=5 // pred_region
        %s528 = ssub.s32 %s20, 2
        // Predicated region
        $region61: #{tpu_custom_call.1} parent=59 // pred_check
          %p529 = pneg %p201
        $region62: #{tpu_custom_call.1} parent=59 // pred_check_branch
          %531 = sbr.rel (%p529) target = $region64
        $region63: #{tpu_custom_call.1} parent=59 // pred_region
          %s532 = sand.u32 %s186, 1
          %s533 = scalar_lea.sflag [#allocation5], %s532
          %s534 = sand.u32 %s186, 1
          %s535 = scalar_lea.vmem [#allocation6], %s534
          %536 = dma.done %s533, 16
        $region64: #{tpu_custom_call.1} parent=59 // pred_fallthru
          _
      $region60: #{tpu_custom_call.1} parent=5 // pred_fallthru
        _
    $region6: #{tpu_custom_call.1} parent=1 // loop_footer
      %s24 = sadd.s32 1, %s20
    $region7: #{tpu_custom_call.1} parent=1 // loop_footer_branch
      %19 = sbr.rel target = $region3
    $region8: #{tpu_custom_call.1} parent=1 // loop_exit
      _
    %537 = vsyncpa [#allocation4], 1
    %s538 = scalar_lea.sflag [#allocation4], 1
    %539 = vsyncpa %s538, 1
    %540 = vsyncpa [#allocation5], 1
    %s541 = scalar_lea.sflag [#allocation5], 1
    %542 = vsyncpa %s541, 1

</llo_original>
